<compile_context>
chip_gen: v7x
topology: tpu7x:2x2x1
jax: 0.10.0
libtpu: 0.0.40
codegen_flags: <defaults>
</compile_context>

<pallas_src>
import itertools
import numpy as np

import jax
import jax.numpy as jnp
from jax.experimental import pallas as pl
from jax.experimental.pallas import tpu as pltpu


def _recip(x):
    """EUP approx reciprocal + one Newton-Raphson step (2 extra VPU ops)."""
    r = pl.reciprocal(x, approx=True)
    return r * (2.0 - x * r)


def _make_cost_kernel(matcher_coeff, use_focal_loss, alpha, gamma):
    w_class = float(matcher_coeff['class'])
    w_bbox = float(matcher_coeff['bbox'])
    w_giou = float(matcher_coeff['giou'])
    eps_giou = 1e-10  # PaddleDetection GIoULoss default eps

    def kernel(tgt_tab_ref, tgt_onehot_ref, boxes_t_ref, logits_t_ref, c_ref):
        # tgt_tab_ref:    [NGT_PAD, 16] f32  cols: cx,cy,w,h,x1,y1,x2,y2,area+eps
        # tgt_onehot_ref: [NGT_PAD, NC] f32  one-hot of target class ids
        # boxes_t_ref:    [4, TQ]            cxcywh predictions (transposed tile)
        # logits_t_ref:   [NC, TQ]           class logits (transposed tile)
        # c_ref:          [NGT_PAD, TQ]      output cost tile
        logits = logits_t_ref[...].astype(jnp.float32)        # [NC, TQ]

        # ---- class cost in class space [NC, TQ] (classes on sublanes)
        if use_focal_loss:
            prob = jax.nn.sigmoid(logits)
            if gamma == 2.0:
                pow_p = jnp.square(prob)                       # VPU square, not EUP pow
                pow_1mp = jnp.square(1.0 - prob)
            else:
                pow_p = prob ** gamma
                pow_1mp = (1.0 - prob) ** gamma
            neg_cost = (1.0 - alpha) * pow_p * (-jnp.log(1.0 - prob + 1e-8))
            pos_cost = alpha * pow_1mp * (-jnp.log(prob + 1e-8))
            class_cost = w_class * (pos_cost - neg_cost)       # [NC, TQ]
        else:
            m = jnp.max(logits, axis=0, keepdims=True)         # sublane reduce [1, TQ]
            e = jnp.exp(logits - m)
            class_cost = (-w_class) * e * _recip(jnp.sum(e, axis=0, keepdims=True))

        # fold the GIoU-loss constant (2*w_giou) through the one-hot gather: each
        # real target row has exactly one 1, padded rows are all-zero (sliced off).
        class_cost = class_cost + (2.0 * w_giou)

        # f32 MXU gather (K = NC is tiny, so f32 multi-pass cost is negligible; no
        # bf16 rounding of the class cost).
        cost = jnp.dot(tgt_onehot_ref[...], class_cost,
                       preferred_element_type=jnp.float32)     # [NGT_PAD, TQ]

        # ---- prediction-side rows (cheap [1, TQ] work, per tile)
        pb = boxes_t_ref[...].astype(jnp.float32)              # [4, TQ]
        pcx, pcy, pw, ph = pb[0:1], pb[1:2], pb[2:3], pb[3:4]
        px1, px2 = pcx - 0.5 * pw, pcx + 0.5 * pw
        py1, py2 = pcy - 0.5 * ph, pcy + 0.5 * ph
        area1 = pw * ph

        # ---- target-side rows (host-precomputed, grid-invariant)
        tt = tgt_tab_ref[...]                                  # [NGT_PAD, 16]
        gcx, gcy = tt[:, 0:1], tt[:, 1:2]
        gw, gh = tt[:, 2:3], tt[:, 3:4]
        gx1, gy1 = tt[:, 4:5], tt[:, 5:6]
        gx2, gy2 = tt[:, 6:7], tt[:, 7:8]
        area2e = tt[:, 8:9]                                    # gw*gh + eps (eps folded)

        # pairwise L1 over cxcywh, weight folded (single multiply)
        cost = cost + w_bbox * (jnp.abs(pcx - gcx) + jnp.abs(pcy - gcy) +
                                jnp.abs(pw - gw) + jnp.abs(ph - gh))

        # pairwise GIoU loss, fused:
        #   w*(1 - giou) = 2w - w*(overlap/union + union/area_c)
        # signed intersection first; enclosing sides = (pw+gw)-iw / (ph+gh)-ih.
        iw = jnp.minimum(px2, gx2) - jnp.maximum(px1, gx1)
        ih = jnp.minimum(py2, gy2) - jnp.maximum(py1, gy1)
        overlap = jnp.maximum(iw, 0.0) * jnp.maximum(ih, 0.0)
        union = area1 + area2e - overlap
        area_c = ((pw + gw) - iw) * ((ph + gh) - ih) + eps_giou
        cost = cost - w_giou * (overlap * _recip(union) + union * _recip(area_c))

        c_ref[...] = cost.astype(c_ref.dtype)

    return kernel


def _linear_sum_assignment_small(cost):
    # TODO(synk): scipy's linear_sum_assignment (Hungarian algorithm) is an inherently
    # sequential host-side algorithm with no clean Pallas equivalent; here we solve it
    # exactly by brute force, which is fine for the small demo sizes.
    nr, nc = cost.shape
    if nr == 0 or nc == 0:
        return np.array([], np.int64), np.array([], np.int64)
    if nc <= nr:
        best_s, best_rows = None, None
        for rows in itertools.permutations(range(nr), nc):
            s = cost[list(rows), list(range(nc))].sum()
            if best_s is None or s < best_s:
                best_s, best_rows = s, rows
        rows = np.array(best_rows, np.int64)
        cols = np.arange(nc, dtype=np.int64)
    else:
        best_s, best_cols = None, None
        for cols in itertools.permutations(range(nc), nr):
            s = cost[list(range(nr)), list(cols)].sum()
            if best_s is None or s < best_s:
                best_s, best_cols = s, cols
        rows = np.arange(nr, dtype=np.int64)
        cols = np.array(best_cols, np.int64)
    order = np.argsort(rows)
    return rows[order], cols[order]


class HungarianMatcher:
    def __init__(self,
                 matcher_coeff={'class': 1, 'bbox': 5, 'giou': 2, 'mask': 1, 'dice': 1},
                 use_focal_loss=False, with_mask=False, num_sample_points=12544,
                 alpha=0.25, gamma=2.0):
        self.matcher_coeff = matcher_coeff
        self.use_focal_loss = use_focal_loss
        self.with_mask = with_mask
        self.num_sample_points = num_sample_points
        self.alpha = alpha
        self.gamma = gamma
        self._kernel = _make_cost_kernel(matcher_coeff, use_focal_loss, alpha, gamma)

    # ---------------- generation-aware tiling ----------------
    @staticmethod
    def _vmem_budget():
        """(scratch budget, vmem_limit_bytes) — v5e/v6e have 128 MiB physical VMEM,
        v7x only 64 MiB, so keep the conservative numbers as the fallback."""
        try:
            cap = getattr(pltpu.get_tpu_info(), "vmem_capacity_bytes", None)
        except Exception:
            cap = None
        if cap is not None and cap >= 100 * 1024 * 1024:          # v5e / v6e
            return 48 * 1024 * 1024, 96 * 1024 * 1024
        return 20 * 1024 * 1024, 32 * 1024 * 1024                 # v7x-safe default

    @staticmethod
    def _choose_tq(bq, ngt_pad, nc, budget):
        # ~12 live [ngt_pad, tq] f32 intermediates + class-cost [nc, tq] temporaries
        # + double-buffered logits / output tiles, per lane column.
        bytes_per_col = 4 * (12 * ngt_pad + 5 * nc + 16)
        tq = budget // bytes_per_col
        tq = max(128, min(1024, (tq // 128) * 128))               # lane tile = 128
        bq_ceil = ((bq + 127) // 128) * 128
        tq = min(tq, bq_ceil)
        # v7x megacore: prefer an even query-tile count so both TensorCores get
        # equal work (no-op / harmless on single-core v5e/v6e).
        n_tiles = -(-bq_ceil // tq)
        if n_tiles > 1 and n_tiles % 2 == 1:
            for cand in range(tq - 128, 127, -128):
                if (-(-bq_ceil // cand)) % 2 == 0:
                    tq = cand
                    break
        return int(tq)

    # ---------------- pallas_call wrapper ----------------
    def _cost_matrix(self, tgt_tab, tgt_onehot, boxes_t, logits_t, tq, vmem_limit):
        ngt_pad, ncols = tgt_tab.shape
        nc = logits_t.shape[0]
        bq_pad = logits_t.shape[1]
        grid = (bq_pad // tq,)
        return pl.pallas_call(
            self._kernel,
            out_shape=jax.ShapeDtypeStruct((ngt_pad, bq_pad), jnp.float32),
            grid_spec=pltpu.PrefetchScalarGridSpec(
                num_scalar_prefetch=0,
                grid=grid,
                in_specs=[
                    # tiny grid-invariant target operands (resident; double-buffer
                    # overhead is negligible at this size)
                    pl.BlockSpec((ngt_pad, ncols), lambda i: (0, 0)),
                    pl.BlockSpec((ngt_pad, nc), lambda i: (0, 0)),
                    # transposed prediction tiles (queries on the lane axis)
                    pl.BlockSpec((4, tq), lambda i: (0, i)),
                    pl.BlockSpec((nc, tq), lambda i: (0, i)),
                ],
                out_specs=pl.BlockSpec((ngt_pad, tq), lambda i: (0, i)),
            ),
            compiler_params=pltpu.CompilerParams(
                dimension_semantics=("parallel",),   # v7x: shard query tiles across TCs
                vmem_limit_bytes=vmem_limit,
            ),
        )(tgt_tab, tgt_onehot, boxes_t, logits_t)

    def _cost_dense(self, boxes, logits, tgt_ids, tgt_bbox):
        """Dense weighted cost matrix [bs*num_queries, ngt] as a numpy array."""
        bs, num_queries = boxes.shape[:2]
        nc = int(logits.shape[-1])
        ngt = int(tgt_ids.shape[0])
        ngt_pad = max(8, ((ngt + 7) // 8) * 8)    # targets on the sublane axis

        # host precompute of all target-side derived rows (grid-invariant)
        tb = np.asarray(tgt_bbox, np.float32)
        gcx, gcy, gw, gh = tb[:, 0], tb[:, 1], tb[:, 2], tb[:, 3]
        tab = np.zeros((ngt_pad, 16), np.float32)
        tab[:ngt, 0], tab[:ngt, 1], tab[:ngt, 2], tab[:ngt, 3] = gcx, gcy, gw, gh
        tab[:ngt, 4] = gcx - 0.5 * gw
        tab[:ngt, 5] = gcy - 0.5 * gh
        tab[:ngt, 6] = gcx + 0.5 * gw
        tab[:ngt, 7] = gcy + 0.5 * gh
        tab[:, 8] = 1e-10                          # eps folded (padded rows stay safe)
        tab[:ngt, 8] += gw * gh

        onehot = np.zeros((ngt_pad, nc), np.float32)
        if ngt > 0:
            onehot[np.arange(ngt), np.asarray(tgt_ids)] = 1.0

        bq = bs * num_queries
        budget, vmem_limit = self._vmem_budget()
        tq = self._choose_tq(bq, ngt_pad, nc, budget)
        bq_pad = ((bq + tq - 1) // tq) * tq

        # keep input dtype (e.g. bf16 logits pass through; kernel widens internally)
        boxes_t = jnp.asarray(boxes).reshape(bq, 4).T       # [4, bq]
        logits_t = jnp.asarray(logits).reshape(bq, nc).T    # [nc, bq]
        if bq_pad != bq:
            boxes_t = jnp.pad(boxes_t, ((0, 0), (0, bq_pad - bq)))
            logits_t = jnp.pad(logits_t, ((0, 0), (0, bq_pad - bq)))

        c_pad = self._cost_matrix(jnp.asarray(tab), jnp.asarray(onehot),
                                  boxes_t, logits_t, tq, vmem_limit)
        c_pad = jax.block_until_ready(c_pad)
        return np.asarray(c_pad)[:ngt, :bq].T               # [bq, ngt]

    # ---------------- forward ----------------
    def forward(self, boxes, logits, gt_bbox, gt_class, pad_gt_mask):
        """boxes [b,q,4], logits [b,q,nc], gt_bbox [b,n,4], gt_class [b,n,1],
        pad_gt_mask [b,n,1]."""
        if self.with_mask:
            raise NotImplementedError
        bs, num_queries = boxes.shape[:2]
        pad_np = np.asarray(pad_gt_mask)
        num_gts = pad_np.sum(axis=(1, 2)).astype(np.int32).tolist()
        if sum(num_gts) == 0:
            return [(np.array([], np.int64), np.array([], np.int64)) for _ in range(bs)]

        # host glue: dynamic-shape boolean gather of the real (non-padded) GTs
        real = pad_np[:, :, 0] > 0.0
        tgt_ids = np.asarray(gt_class)[real].reshape(-1).astype(np.int64)   # [NGT]
        tgt_bbox = np.asarray(gt_bbox)[real].astype(np.float32)             # [NGT, 4]

        C = self._cost_dense(boxes, logits, tgt_ids, tgt_bbox)
        ngt = int(tgt_ids.shape[0])
        C = C.reshape(bs, num_queries, ngt)

        offsets = np.cumsum([0] + num_gts)
        outs = []
        for i in range(bs):
            c = C[i][:, offsets[i]:offsets[i + 1]]
            rows, cols = _linear_sum_assignment_small(c)
            outs.append((rows.astype(np.int64), cols.astype(np.int64)))
        return outs

    __call__ = forward


def _reference_cost(boxes_flat, logits_flat, tgt_ids, tgt_bbox, coeff,
                    use_focal_loss=False, alpha=0.25, gamma=2.0):
    """Pure numpy (f64) reference of the padding-free cost matrix."""
    logits = np.asarray(logits_flat, np.float64)
    if use_focal_loss:
        prob = 1.0 / (1.0 + np.exp(-logits))
        out_prob = prob[:, tgt_ids]
        neg = (1.0 - alpha) * out_prob ** gamma * (-np.log(1.0 - out_prob + 1e-8))
        pos = alpha * (1.0 - out_prob) ** gamma * (-np.log(out_prob + 1e-8))
        cost_class = pos - neg
    else:
        e = np.exp(logits - logits.max(-1, keepdims=True))
        prob = e / e.sum(-1, keepdims=True)
        cost_class = -prob[:, tgt_ids]

    ob = np.asarray(boxes_flat, np.float64)[:, None, :]
    tb = np.asarray(tgt_bbox, np.float64)[None, :, :]
    cost_bbox = np.abs(ob - tb).sum(-1)

    def to_xyxy(b):
        cx, cy, w, h = b[..., 0], b[..., 1], b[..., 2], b[..., 3]
        return cx - 0.5 * w, cy - 0.5 * h, cx + 0.5 * w, cy + 0.5 * h

    px1, py1, px2, py2 = to_xyxy(ob)
    gx1, gy1, gx2, gy2 = to_xyxy(tb)
    eps = 1e-10
    wi = np.clip(np.minimum(px2, gx2) - np.maximum(px1, gx1), 0, None)
    hi = np.clip(np.minimum(py2, gy2) - np.maximum(py1, gy1), 0, None)
    overlap = wi * hi
    union = (px2 - px1) * (py2 - py1) + (gx2 - gx1) * (gy2 - gy1) - overlap + eps
    iou = overlap / union
    area_c = (np.maximum(px2, gx2) - np.minimum(px1, gx1)) * \
             (np.maximum(py2, gy2) - np.minimum(py1, gy1)) + eps
    cost_giou = 1.0 - (iou - (area_c - union) / area_c)
    return (coeff['class'] * cost_class + coeff['bbox'] * cost_bbox +
            coeff['giou'] * cost_giou)


if __name__ == "__main__":
    key = jax.random.PRNGKey(0)
    bs, num_queries, num_classes, n_max = 2, 8, 8, 4

    k1, k2, k3, k4, k5 = jax.random.split(key, 5)
    # predicted boxes in cxcywh, inside the unit square
    cxcy = jax.random.uniform(k1, (bs, num_queries, 2), minval=0.2, maxval=0.8)
    wh = jax.random.uniform(k2, (bs, num_queries, 2), minval=0.05, maxval=0.3)
    boxes = jnp.concatenate([cxcy, wh], axis=-1)                     # [2, 8, 4]
    logits = jax.random.normal(k3, (bs, num_queries, num_classes))   # [2, 8, 8]

    # padded GT tensors: 2 real GTs in batch 0, 3 in batch 1
    gcxcy = jax.random.uniform(k4, (bs, n_max, 2), minval=0.2, maxval=0.8)
    gwh = jax.random.uniform(k5, (bs, n_max, 2), minval=0.05, maxval=0.3)
    gt_bbox = jnp.concatenate([gcxcy, gwh], axis=-1)                 # [2, 4, 4]
    gt_class = jnp.array([[[1], [3], [0], [0]],
                          [[2], [5], [7], [0]]], dtype=jnp.int32)    # [2, 4, 1]
    pad_gt_mask = jnp.array([[[1.], [1.], [0.], [0.]],
                             [[1.], [1.], [1.], [0.]]], dtype=jnp.float32)  # [2, 4, 1]

    # host-side GT gather used by the reference checks
    pad_np = np.asarray(pad_gt_mask)
    real = pad_np[:, :, 0] > 0.0
    tgt_ids = np.asarray(gt_class)[real].reshape(-1).astype(np.int64)
    tgt_bbox = np.asarray(gt_bbox)[real].astype(np.float32)
    boxes_flat = np.asarray(boxes, np.float32).reshape(bs * num_queries, 4)
    logits_flat = np.asarray(logits, np.float32).reshape(bs * num_queries, num_classes)

    # ---- non-focal (softmax) path
    matcher = HungarianMatcher()
    indices = matcher(boxes, logits, gt_bbox, gt_class, pad_gt_mask)
    c_kernel = matcher._cost_dense(boxes, logits, tgt_ids, tgt_bbox)
    c_ref = _reference_cost(boxes_flat, logits_flat, tgt_ids, tgt_bbox,
                            matcher.matcher_coeff, use_focal_loss=False)
    # f32 class-cost matmul + Newton-refined reciprocals -> tight tolerance vs f64
    assert np.allclose(c_kernel, c_ref, rtol=5e-3, atol=5e-3), \
        f"softmax path max abs err {np.abs(c_kernel - c_ref).max()}"

    # ---- focal path
    matcher_f = HungarianMatcher(use_focal_loss=True)
    indices_f = matcher_f(boxes, logits, gt_bbox, gt_class, pad_gt_mask)
    c_kernel_f = matcher_f._cost_dense(boxes, logits, tgt_ids, tgt_bbox)
    c_ref_f = _reference_cost(boxes_flat, logits_flat, tgt_ids, tgt_bbox,
                              matcher_f.matcher_coeff, use_focal_loss=True,
                              alpha=matcher_f.alpha, gamma=matcher_f.gamma)
    assert np.allclose(c_kernel_f, c_ref_f, rtol=5e-3, atol=5e-3), \
        f"focal path max abs err {np.abs(c_kernel_f - c_ref_f).max()}"

    # basic shape checks on the assignment result
    num_gts = pad_np.sum(axis=(1, 2)).astype(np.int32).tolist()
    for idx_set in (indices, indices_f):
        for i, (ri, ci) in enumerate(idx_set):
            expect = min(num_queries, num_gts[i])
            assert ri.shape == (expect,) and ci.shape == (expect,)
            assert ri.dtype == np.int64 and ci.dtype == np.int64

    print("KERNEL_OK")
</pallas_src>

<mosaic_0001>
module attributes {stable_mosaic.version = 11 : i64} {
  func.func @kernel(%arg0: i32, %arg1: memref<8x16xf32, #tpu.memory_space<vmem>>, %arg2: memref<8x8xf32, #tpu.memory_space<vmem>>, %arg3: memref<4x128xf32, #tpu.memory_space<vmem>>, %arg4: memref<8x128xf32, #tpu.memory_space<vmem>>, %arg5: memref<8x128xf32, #tpu.memory_space<vmem>>) attributes {dimension_semantics = [#tpu.dimension_semantics<parallel>], iteration_bounds = array<i64: 1>, scalar_prefetch = 0 : i64, scratch_operands = 0 : i64, tpu.core_type = #tpu.core_type<tc>, window_params = [{pipeline_mode = #tpu.pipeline_mode<synchronous>, transform_indices = @transform_0, window_bounds = array<i64: 8, 16>}, {pipeline_mode = #tpu.pipeline_mode<synchronous>, transform_indices = @transform_1, window_bounds = array<i64: 8, 8>}, {transform_indices = @transform_2, window_bounds = array<i64: 4, 128>}, {transform_indices = @transform_3, window_bounds = array<i64: 8, 128>}, {transform_indices = @transform_4, window_bounds = array<i64: 8, 128>}]} {
    %c0 = arith.constant 0 : index
    %c0_0 = arith.constant 0 : index
    %0 = vector.load %arg4[%c0, %c0_0] : memref<8x128xf32, #tpu.memory_space<vmem>>, vector<8x128xf32>
    %cst = arith.constant dense<0xFF800000> : vector<128xf32>
    %1 = vector.multi_reduction <maximumf>, %0, %cst [0] : vector<8x128xf32> to vector<128xf32>
    %2 = vector.shape_cast %1 : vector<128xf32> to vector<1x128xf32>
    %3 = vector.broadcast %2 : vector<1x128xf32> to vector<8x128xf32>
    %4 = arith.subf %0, %3 : vector<8x128xf32>
    %5 = math.exp %4 : vector<8x128xf32>
    %cst_1 = arith.constant -1.000000e+00 : f32
    %6 = vector.broadcast %cst_1 : f32 to vector<8x128xf32>
    %7 = arith.mulf %6, %5 : vector<8x128xf32>
    %cst_2 = arith.constant dense<0.000000e+00> : vector<128xf32>
    %8 = vector.multi_reduction <add>, %5, %cst_2 [0] : vector<8x128xf32> to vector<128xf32>
    %9 = vector.shape_cast %8 : vector<128xf32> to vector<1x128xf32>
    %10 = tpu.reciprocal %9 {approx = true} : vector<1x128xf32> -> vector<1x128xf32>
    %11 = arith.mulf %9, %10 : vector<1x128xf32>
    %cst_3 = arith.constant 2.000000e+00 : f32
    %12 = vector.broadcast %cst_3 : f32 to vector<1x128xf32>
    %13 = arith.subf %12, %11 : vector<1x128xf32>
    %14 = arith.mulf %10, %13 : vector<1x128xf32>
    %15 = vector.broadcast %14 : vector<1x128xf32> to vector<8x128xf32>
    %16 = arith.mulf %7, %15 : vector<8x128xf32>
    %cst_4 = arith.constant 4.000000e+00 : f32
    %17 = vector.broadcast %cst_4 : f32 to vector<8x128xf32>
    %18 = arith.addf %16, %17 : vector<8x128xf32>
    %c0_5 = arith.constant 0 : index
    %c0_6 = arith.constant 0 : index
    %19 = vector.load %arg2[%c0_5, %c0_6] : memref<8x8xf32, #tpu.memory_space<vmem>>, vector<8x8xf32>
    %cst_7 = arith.constant dense<0.000000e+00> : vector<8x128xf32>
    %20 = tpu.matmul %19, %18, %cst_7 {dimension_numbers = #tpu.dot_dimension_numbers<[1], [0], [0], [1], [0, 0, 1, 1], [], []>} : vector<8x8xf32>, vector<8x128xf32>, vector<8x128xf32> -> vector<8x128xf32>
    %c0_8 = arith.constant 0 : index
    %c0_9 = arith.constant 0 : index
    %21 = vector.load %arg3[%c0_8, %c0_9] : memref<4x128xf32, #tpu.memory_space<vmem>>, vector<4x128xf32>
    %22 = vector.extract_strided_slice %21 {offsets = [0, 0], sizes = [1, 128], strides = [1, 1]} : vector<4x128xf32> to vector<1x128xf32>
    %23 = vector.extract_strided_slice %21 {offsets = [1, 0], sizes = [1, 128], strides = [1, 1]} : vector<4x128xf32> to vector<1x128xf32>
    %24 = vector.extract_strided_slice %21 {offsets = [2, 0], sizes = [1, 128], strides = [1, 1]} : vector<4x128xf32> to vector<1x128xf32>
    %25 = vector.extract_strided_slice %21 {offsets = [3, 0], sizes = [1, 128], strides = [1, 1]} : vector<4x128xf32> to vector<1x128xf32>
    %cst_10 = arith.constant 5.000000e-01 : f32
    %26 = vector.broadcast %cst_10 : f32 to vector<1x128xf32>
    %27 = arith.mulf %26, %24 : vector<1x128xf32>
    %28 = arith.subf %22, %27 : vector<1x128xf32>
    %cst_11 = arith.constant 5.000000e-01 : f32
    %29 = vector.broadcast %cst_11 : f32 to vector<1x128xf32>
    %30 = arith.mulf %29, %24 : vector<1x128xf32>
    %31 = arith.addf %22, %30 : vector<1x128xf32>
    %cst_12 = arith.constant 5.000000e-01 : f32
    %32 = vector.broadcast %cst_12 : f32 to vector<1x128xf32>
    %33 = arith.mulf %32, %25 : vector<1x128xf32>
    %34 = arith.subf %23, %33 : vector<1x128xf32>
    %cst_13 = arith.constant 5.000000e-01 : f32
    %35 = vector.broadcast %cst_13 : f32 to vector<1x128xf32>
    %36 = arith.mulf %35, %25 : vector<1x128xf32>
    %37 = arith.addf %23, %36 : vector<1x128xf32>
    %38 = arith.mulf %24, %25 : vector<1x128xf32>
    %c0_14 = arith.constant 0 : index
    %c0_15 = arith.constant 0 : index
    %39 = vector.load %arg1[%c0_14, %c0_15] : memref<8x16xf32, #tpu.memory_space<vmem>>, vector<8x16xf32>
    %40 = vector.extract_strided_slice %39 {offsets = [0, 0], sizes = [8, 1], strides = [1, 1]} : vector<8x16xf32> to vector<8x1xf32>
    %41 = vector.extract_strided_slice %39 {offsets = [0, 1], sizes = [8, 1], strides = [1, 1]} : vector<8x16xf32> to vector<8x1xf32>
    %42 = vector.extract_strided_slice %39 {offsets = [0, 2], sizes = [8, 1], strides = [1, 1]} : vector<8x16xf32> to vector<8x1xf32>
    %43 = vector.extract_strided_slice %39 {offsets = [0, 3], sizes = [8, 1], strides = [1, 1]} : vector<8x16xf32> to vector<8x1xf32>
    %44 = vector.extract_strided_slice %39 {offsets = [0, 4], sizes = [8, 1], strides = [1, 1]} : vector<8x16xf32> to vector<8x1xf32>
    %45 = vector.extract_strided_slice %39 {offsets = [0, 5], sizes = [8, 1], strides = [1, 1]} : vector<8x16xf32> to vector<8x1xf32>
    %46 = vector.extract_strided_slice %39 {offsets = [0, 6], sizes = [8, 1], strides = [1, 1]} : vector<8x16xf32> to vector<8x1xf32>
    %47 = vector.extract_strided_slice %39 {offsets = [0, 7], sizes = [8, 1], strides = [1, 1]} : vector<8x16xf32> to vector<8x1xf32>
    %48 = vector.extract_strided_slice %39 {offsets = [0, 8], sizes = [8, 1], strides = [1, 1]} : vector<8x16xf32> to vector<8x1xf32>
    %49 = vector.broadcast %22 : vector<1x128xf32> to vector<8x128xf32>
    %50 = vector.broadcast %40 : vector<8x1xf32> to vector<8x128xf32>
    %51 = arith.subf %49, %50 : vector<8x128xf32>
    %52 = math.absf %51 : vector<8x128xf32>
    %53 = vector.broadcast %23 : vector<1x128xf32> to vector<8x128xf32>
    %54 = vector.broadcast %41 : vector<8x1xf32> to vector<8x128xf32>
    %55 = arith.subf %53, %54 : vector<8x128xf32>
    %56 = math.absf %55 : vector<8x128xf32>
    %57 = arith.addf %52, %56 : vector<8x128xf32>
    %58 = vector.broadcast %24 : vector<1x128xf32> to vector<8x128xf32>
    %59 = vector.broadcast %42 : vector<8x1xf32> to vector<8x128xf32>
    %60 = arith.subf %58, %59 : vector<8x128xf32>
    %61 = math.absf %60 : vector<8x128xf32>
    %62 = arith.addf %57, %61 : vector<8x128xf32>
    %63 = vector.broadcast %25 : vector<1x128xf32> to vector<8x128xf32>
    %64 = vector.broadcast %43 : vector<8x1xf32> to vector<8x128xf32>
    %65 = arith.subf %63, %64 : vector<8x128xf32>
    %66 = math.absf %65 : vector<8x128xf32>
    %67 = arith.addf %62, %66 : vector<8x128xf32>
    %cst_16 = arith.constant 5.000000e+00 : f32
    %68 = vector.broadcast %cst_16 : f32 to vector<8x128xf32>
    %69 = arith.mulf %68, %67 : vector<8x128xf32>
    %70 = arith.addf %20, %69 : vector<8x128xf32>
    %71 = vector.broadcast %31 : vector<1x128xf32> to vector<8x128xf32>
    %72 = vector.broadcast %46 : vector<8x1xf32> to vector<8x128xf32>
    %73 = arith.minimumf %71, %72 : vector<8x128xf32>
    %74 = vector.broadcast %28 : vector<1x128xf32> to vector<8x128xf32>
    %75 = vector.broadcast %44 : vector<8x1xf32> to vector<8x128xf32>
    %76 = arith.maximumf %74, %75 : vector<8x128xf32>
    %77 = arith.subf %73, %76 : vector<8x128xf32>
    %78 = vector.broadcast %37 : vector<1x128xf32> to vector<8x128xf32>
    %79 = vector.broadcast %47 : vector<8x1xf32> to vector<8x128xf32>
    %80 = arith.minimumf %78, %79 : vector<8x128xf32>
    %81 = vector.broadcast %34 : vector<1x128xf32> to vector<8x128xf32>
    %82 = vector.broadcast %45 : vector<8x1xf32> to vector<8x128xf32>
    %83 = arith.maximumf %81, %82 : vector<8x128xf32>
    %84 = arith.subf %80, %83 : vector<8x128xf32>
    %cst_17 = arith.constant 0.000000e+00 : f32
    %85 = vector.broadcast %cst_17 : f32 to vector<8x128xf32>
    %86 = arith.maximumf %77, %85 : vector<8x128xf32>
    %cst_18 = arith.constant 0.000000e+00 : f32
    %87 = vector.broadcast %cst_18 : f32 to vector<8x128xf32>
    %88 = arith.maximumf %84, %87 : vector<8x128xf32>
    %89 = arith.mulf %86, %88 : vector<8x128xf32>
    %90 = vector.broadcast %38 : vector<1x128xf32> to vector<8x128xf32>
    %91 = vector.broadcast %48 : vector<8x1xf32> to vector<8x128xf32>
    %92 = arith.addf %90, %91 : vector<8x128xf32>
    %93 = arith.subf %92, %89 : vector<8x128xf32>
    %94 = vector.broadcast %24 : vector<1x128xf32> to vector<8x128xf32>
    %95 = vector.broadcast %42 : vector<8x1xf32> to vector<8x128xf32>
    %96 = arith.addf %94, %95 : vector<8x128xf32>
    %97 = arith.subf %96, %77 : vector<8x128xf32>
    %98 = vector.broadcast %25 : vector<1x128xf32> to vector<8x128xf32>
    %99 = vector.broadcast %43 : vector<8x1xf32> to vector<8x128xf32>
    %100 = arith.addf %98, %99 : vector<8x128xf32>
    %101 = arith.subf %100, %84 : vector<8x128xf32>
    %102 = arith.mulf %97, %101 : vector<8x128xf32>
    %cst_19 = arith.constant 1.000000e-10 : f32
    %103 = vector.broadcast %cst_19 : f32 to vector<8x128xf32>
    %104 = arith.addf %102, %103 : vector<8x128xf32>
    %105 = tpu.reciprocal %93 {approx = true} : vector<8x128xf32> -> vector<8x128xf32>
    %106 = arith.mulf %93, %105 : vector<8x128xf32>
    %cst_20 = arith.constant 2.000000e+00 : f32
    %107 = vector.broadcast %cst_20 : f32 to vector<8x128xf32>
    %108 = arith.subf %107, %106 : vector<8x128xf32>
    %109 = arith.mulf %105, %108 : vector<8x128xf32>
    %110 = arith.mulf %89, %109 : vector<8x128xf32>
    %111 = tpu.reciprocal %104 {approx = true} : vector<8x128xf32> -> vector<8x128xf32>
    %112 = arith.mulf %104, %111 : vector<8x128xf32>
    %cst_21 = arith.constant 2.000000e+00 : f32
    %113 = vector.broadcast %cst_21 : f32 to vector<8x128xf32>
    %114 = arith.subf %113, %112 : vector<8x128xf32>
    %115 = arith.mulf %111, %114 : vector<8x128xf32>
    %116 = arith.mulf %93, %115 : vector<8x128xf32>
    %117 = arith.addf %110, %116 : vector<8x128xf32>
    %cst_22 = arith.constant 2.000000e+00 : f32
    %118 = vector.broadcast %cst_22 : f32 to vector<8x128xf32>
    %119 = arith.mulf %118, %117 : vector<8x128xf32>
    %120 = arith.subf %70, %119 : vector<8x128xf32>
    %c0_23 = arith.constant 0 : index
    %c0_24 = arith.constant 0 : index
    %121 = vector.load %arg5[%c0_23, %c0_24] : memref<8x128xf32, #tpu.memory_space<vmem>>, vector<8x128xf32>
    tpu.vector_store %arg5[%c0_23, %c0_24], %120 {strides = array<i32>} : memref<8x128xf32, #tpu.memory_space<vmem>>, vector<8x128xf32>,
    return
  }
  func.func @transform_0(%arg0: i32) -> (i32, i32) {
    %c0_i32 = arith.constant 0 : i32
    %c0_i32_0 = arith.constant 0 : i32
    %c0_i32_1 = arith.constant 0 : i32
    return %c0_i32, %c0_i32_0 : i32, i32
  }
  func.func @transform_1(%arg0: i32) -> (i32, i32) {
    %c0_i32 = arith.constant 0 : i32
    %c0_i32_0 = arith.constant 0 : i32
    %c0_i32_1 = arith.constant 0 : i32
    return %c0_i32, %c0_i32_0 : i32, i32
  }
  func.func @transform_2(%arg0: i32) -> (i32, i32) {
    %c0_i32 = arith.constant 0 : i32
    %c0_i32_0 = arith.constant 0 : i32
    return %c0_i32, %arg0 : i32, i32
  }
  func.func @transform_3(%arg0: i32) -> (i32, i32) {
    %c0_i32 = arith.constant 0 : i32
    %c0_i32_0 = arith.constant 0 : i32
    return %c0_i32, %arg0 : i32, i32
  }
  func.func @transform_4(%arg0: i32) -> (i32, i32) {
    %c0_i32 = arith.constant 0 : i32
    %c0_i32_0 = arith.constant 0 : i32
    return %c0_i32, %arg0 : i32, i32
  }
}

</mosaic_0001>

<llo_original>
// kernel: tpu_custom_call.1
$region0: #{tpu_custom_call.1}
  #allocation0 [shape = 'u32[]', space=smem, size = 0x4, offset = 0x4, fixed_abs, tag = 'smem constant byte address 0x4 - core index']
  #allocation1 [shape = 'u32[144,128]{1,0:T(1,128)}', space=vmem, size = 0x12000, scoped, tag = 'internal scratch']
  %s0 = inlined_call_operand.hbm [shape: f32[8,16], index: 0, kind: input, shape index: {}]
  %s1 = inlined_call_operand.hbm [shape: f32[8,8], index: 1, kind: input, shape index: {}]
  %s2 = inlined_call_operand.hbm [shape: f32[4,128], index: 2, kind: input, shape index: {}]
  %s3 = inlined_call_operand.vmem [shape: f32[8,128], index: 3, kind: input, shape index: {}]
  %s4 = inlined_call_operand.hbm [shape: f32[8,128], index: 4, kind: output, shape index: {}]
  %s5 = sld [smem:[#allocation0]]
  $region38: #{tpu_custom_call.1} parent=0
    _
  %s7 = ssub.s32 1, %s5
  %s8 = scalar_select 0, %s7, %s5
  $region1: #{tpu_custom_call.1} parent=0
    #allocation2 [shape = 'u8[4096]{0}', space=vmem, size = 0x1000, scoped, tag = 'input window, operand 0, single buffered']
    #allocation3 [shape = 's32[1]{0}', space=sflag, size = 0x4, scoped, tag = 'scoped memory for tpu_custom_call.1']
    #allocation4 [shape = 's32[1]{0}', space=sflag, size = 0x4, scoped, tag = 'scoped memory for tpu_custom_call.1']
    #allocation5 [shape = 'u8[4096]{0}', space=vmem, size = 0x1000, scoped, tag = 'input window, operand 1, single buffered']
    #allocation6 [shape = 's32[1]{0}', space=sflag, size = 0x4, scoped, tag = 'scoped memory for tpu_custom_call.1']
    #allocation7 [shape = 'u8[2048]{0}', space=vmem, size = 0x800, scoped, tag = 'input window, operand 2, single buffered']
    #allocation8 [shape = 'u8[4096]{0}', space=vmem, size = 0x1000, scoped, tag = 'output window, operand 0, single buffered']
    %9 = vsyncpa [#allocation3], 0
    %10 = vsyncpa [#allocation6], 0
    %11 = vsyncpa [#allocation4], 0
    // Predicated region
    $region2: #{tpu_custom_call.1} parent=1 // pred_check
      _
    $region3: #{tpu_custom_call.1} parent=1 // pred_check_branch
      %13 = sbr.rel (0) target = $region5
    $region4: #{tpu_custom_call.1} parent=1 // pred_region
      %s15 = ssub.s32 128, 128
      %16 = vsyncadd [#allocation3], %s15
      %s18 = sshll.u32 [#allocation2], 4
      %s19 = int_to_ptr.vmem [resolvable:$true] %s18
      %21 = dma.hbm_to_vmem [thread:$0]  %s0, 128, %s19, [#allocation3]
    $region5: #{tpu_custom_call.1} parent=1 // pred_fallthru
      _
    // Predicated region
    $region6: #{tpu_custom_call.1} parent=1 // pred_check
      _
    $region7: #{tpu_custom_call.1} parent=1 // pred_check_branch
      %23 = sbr.rel (0) target = $region9
    $region8: #{tpu_custom_call.1} parent=1 // pred_region
      %s25 = ssub.s32 128, 128
      %26 = vsyncadd [#allocation6], %s25
      %s28 = sshll.u32 [#allocation5], 4
      %s29 = int_to_ptr.vmem [resolvable:$true] %s28
      %31 = dma.hbm_to_vmem [thread:$0]  %s1, 128, %s29, [#allocation6]
    $region9: #{tpu_custom_call.1} parent=1 // pred_fallthru
      _
    // Predicated region
    $region10: #{tpu_custom_call.1} parent=1 // pred_check
      _
    $region11: #{tpu_custom_call.1} parent=1 // pred_check_branch
      %33 = sbr.rel (0) target = $region13
    $region12: #{tpu_custom_call.1} parent=1 // pred_region
      %s35 = ssub.s32 64, 64
      %36 = vsyncadd [#allocation6], %s35
      %s38 = sshll.u32 [#allocation7], 4
      %s39 = int_to_ptr.vmem [resolvable:$true] %s38
      %41 = dma.hbm_to_vmem [thread:$0]  %s2, 64, %s39, [#allocation6]
    $region13: #{tpu_custom_call.1} parent=1 // pred_fallthru
      _
    // Predicated region
    $region14: #{tpu_custom_call.1} parent=1 // pred_check
      _
    $region15: #{tpu_custom_call.1} parent=1 // pred_check_branch
      %43 = sbr.rel (0) target = $region17
    $region16: #{tpu_custom_call.1} parent=1 // pred_region
      _
    $region17: #{tpu_custom_call.1} parent=1 // pred_fallthru
      _
    // Predicated region
    $region18: #{tpu_custom_call.1} parent=1 // pred_check
      _
    $region19: #{tpu_custom_call.1} parent=1 // pred_check_branch
      %45 = sbr.rel (0) target = $region21
    $region20: #{tpu_custom_call.1} parent=1 // pred_region
      %46 = dma.done [#allocation3], 128
    $region21: #{tpu_custom_call.1} parent=1 // pred_fallthru
      _
    // Predicated region
    $region22: #{tpu_custom_call.1} parent=1 // pred_check
      _
    $region23: #{tpu_custom_call.1} parent=1 // pred_check_branch
      %48 = sbr.rel (0) target = $region25
    $region24: #{tpu_custom_call.1} parent=1 // pred_region
      %49 = dma.done [#allocation6], 128
    $region25: #{tpu_custom_call.1} parent=1 // pred_fallthru
      _
    // Predicated region
    $region26: #{tpu_custom_call.1} parent=1 // pred_check
      _
    $region27: #{tpu_custom_call.1} parent=1 // pred_check_branch
      %51 = sbr.rel (0) target = $region29
    $region28: #{tpu_custom_call.1} parent=1 // pred_region
      %52 = dma.done [#allocation6], 64
    $region29: #{tpu_custom_call.1} parent=1 // pred_fallthru
      _
    %v53 = vld [vmem:[%s3] sm:$0xff]
    %v54 = vrot.slane %v53, 4
    %v55 = vmax.f32 %v53, %v54
    %v56 = vrot.slane %v55, 2
    %v57 = vmax.f32 %v55, %v56
    %v58 = vrot.slane %v57, 1
    %v59 = vmax.f32 %v57, %v58
    %v60 = vsub.f32 %v53, %v59
    %v61 = vmul.f32 %v60, 1.442695
    %v62 = vpow.pop %v61
    %v63 = vmul.f32 %v62, -1.0
    %v64 = vrot.slane %v62, 4
    %v65 = vadd.f32 %v62, %v64
    %v66 = vrot.slane %v65, 2
    %v67 = vadd.f32 %v65, %v66
    %v68 = vrot.slane %v67, 1
    %v69 = vadd.f32 %v67, %v68
    %v70 = vrcp.pop %v69
    %v71 = vmul.f32 %v69, %v70
    %v72 = vsub.f32 2.0, %v71
    %v73 = vmul.f32 %v70, %v72
    %v74 = vmul.f32 %v63, %v73
    %v75 = vadd.f32 %v74, 4.0
    %v76 = vld [vmem:[#allocation5] sm:$0xff]
    %v77 = vld [vmem:[#allocation7] sm:$0xf]
    %v78 = vmul.f32 %v77, 0.5
    %v80 = vrot.slane %v78, 2
    %v82 = vsub.f32 %v77, %v80
    %v83 = vadd.f32 %v77, %v80
    %v85 = vrot.slane %v77, 1
    %v87 = vmul.f32 %v77, %v85
    %v88 = vld [vmem:[#allocation2] sm:$0xff]
    %v89 = vlaneseq
    %v90 = vshrl.u32 %v89, 7
    %v91 = vsub.s32 0, %v90
    %v92 = vrot.slane %v77, %v91
    %94 = vset.pattern.permute.xlu0 0
    %95 = vperm.xlu0 %94, %v88
    %v96 = vpop.permute.xlu0 %95
    %v98 = vsub.f32 %v92, %v96
    %v99 = vand.u32 2147483647, %v98
    %v100 = vlaneseq
    %v101 = vshrl.u32 %v100, 7
    %v102 = vsub.s32 1, %v101
    %v103 = vrot.slane %v77, %v102
    %104 = vset.pattern.permute.xlu0 1
    %105 = vperm.xlu0 %104, %v88
    %v106 = vpop.permute.xlu0 %105
    %v108 = vsub.f32 %v103, %v106
    %v109 = vand.u32 2147483647, %v108
    %v110 = vadd.f32 %v99, %v109
    %v111 = vlaneseq
    %v112 = vshrl.u32 %v111, 7
    %v113 = vsub.s32 2, %v112
    %v114 = vrot.slane %v77, %v113
    %115 = vset.pattern.permute.xlu0 2
    %116 = vperm.xlu0 %115, %v88
    %v117 = vpop.permute.xlu0 %116
    %v119 = vsub.f32 %v114, %v117
    %v120 = vand.u32 2147483647, %v119
    %v121 = vadd.f32 %v110, %v120
    %v122 = vlaneseq
    %v123 = vshrl.u32 %v122, 7
    %v124 = vsub.s32 3, %v123
    %v125 = vrot.slane %v77, %v124
    %126 = vset.pattern.permute.xlu0 3
    %127 = vperm.xlu0 %126, %v88
    %v128 = vpop.permute.xlu0 %127
    %v130 = vsub.f32 %v125, %v128
    %v131 = vand.u32 2147483647, %v130
    %v132 = vadd.f32 %v121, %v131
    %v133 = vmul.f32 %v132, 5.0
    %vm134 = vcmask 64512
    %v136 = vsel %vm134, %v76, 0
    %138 = vmatprep.subr.mxu0 0.0
    %139 = vmatpush1.msra.mxu0 %v75
    %140 = vmatprep.subr.mxu0 0.0
    %141 = vmatpush1.msra.mxu0 0.0
    %142 = vmatprep.subr.mxu0 0.0
    %143 = vmatpush1.msra.mxu0 0.0
    %144 = vmatprep.subr.mxu0 0.0
    %145 = vmatpush1.msra.mxu0 0.0
    %146 = vmatprep.subr.mxu0 0.0
    %147 = vmatpush1.msra.mxu0 0.0
    %148 = vmatprep.subr.mxu0 0.0
    %149 = vmatpush1.msra.mxu0 0.0
    %150 = vmatprep.subr.mxu0 0.0
    %151 = vmatpush1.msra.mxu0 0.0
    %152 = vmatprep.subr.mxu0 0.0
    %153 = vmatpush1.msra.mxu0 0.0
    %154 = vmatprep.subr.mxu0 0.0
    %155 = vmatpush1.msra.mxu0 0.0
    %156 = vmatprep.subr.mxu0 0.0
    %157 = vmatpush1.msra.mxu0 0.0
    %158 = vmatprep.subr.mxu0 0.0
    %159 = vmatpush1.msra.mxu0 0.0
    %160 = vmatprep.subr.mxu0 0.0
    %161 = vmatpush1.msra.mxu0 0.0
    %162 = vmatprep.subr.mxu0 0.0
    %163 = vmatpush1.msra.mxu0 0.0
    %164 = vmatprep.subr.mxu0 0.0
    %165 = vmatpush1.msra.mxu0 0.0
    %166 = vmatprep.subr.mxu0 0.0
    %167 = vmatpush1.msra.mxu0 0.0
    %168 = vmatprep.subr.mxu0 0.0
    %169 = vmatpush1.msra.mxu0 0.0
    %170 = vmatprep.subr.mxu0 0.0
    %171 = vmatpush1.msra.mxu0 0.0
    %172 = vmatprep.subr.mxu0 0.0
    %173 = vmatpush1.msra.mxu0 0.0
    %174 = vmatprep.subr.mxu0 0.0
    %175 = vmatpush1.msra.mxu0 0.0
    %176 = vmatprep.subr.mxu0 0.0
    %177 = vmatpush1.msra.mxu0 0.0
    %178 = vmatprep.subr.mxu0 0.0
    %179 = vmatpush1.msra.mxu0 0.0
    %180 = vmatprep.subr.mxu0 0.0
    %181 = vmatpush1.msra.mxu0 0.0
    %182 = vmatprep.subr.mxu0 0.0
    %183 = vmatpush1.msra.mxu0 0.0
    %184 = vmatprep.subr.mxu0 0.0
    %185 = vmatpush1.msra.mxu0 0.0
    %186 = vmatprep.subr.mxu0 0.0
    %187 = vmatpush1.msra.mxu0 0.0
    %188 = vmatprep.subr.mxu0 0.0
    %189 = vmatpush1.msra.mxu0 0.0
    %190 = vmatprep.subr.mxu0 0.0
    %191 = vmatpush1.msra.mxu0 0.0
    %192 = vmatprep.subr.mxu0 0.0
    %193 = vmatpush1.msra.mxu0 0.0
    %194 = vmatprep.subr.mxu0 0.0
    %195 = vmatpush1.msra.mxu0 0.0
    %196 = vmatprep.subr.mxu0 0.0
    %197 = vmatpush1.msra.mxu0 0.0
    %198 = vmatprep.subr.mxu0 0.0
    %199 = vmatpush1.msra.mxu0 0.0
    %200 = vmatprep.subr.mxu0 0.0
    %201 = vmatpush1.msra.mxu0 0.0
    %202 = vmatprep.mubr.f32.mxu0 0.0
    %203 = vmatmul.mubr.f32.gmra.mrb[0].mxu0 %v136
    %v204 = vpop.f32.mrb[0].mxu0
    %v205 = vadd.f32 %v133, %v204
    %v206 = vpop.f32.mrb[0].mxu0
    %207 = vdwg.mxu0
    %v208 = vlaneseq
    %v209 = vshrl.u32 %v208, 7
    %v210 = vsub.s32 0, %v209
    %v211 = vrot.slane %v83, %v210
    %212 = vset.pattern.permute.xlu0 6
    %213 = vperm.xlu0 %212, %v88
    %v214 = vpop.permute.xlu0 %213
    %v216 = vmin.f32 %v211, %v214
    %v217 = vlaneseq
    %v218 = vshrl.u32 %v217, 7
    %v219 = vsub.s32 0, %v218
    %v220 = vrot.slane %v82, %v219
    %221 = vset.pattern.permute.xlu0 4
    %222 = vperm.xlu0 %221, %v88
    %v223 = vpop.permute.xlu0 %222
    %v225 = vmax.f32 %v220, %v223
    %v226 = vsub.f32 %v216, %v225
    %v227 = vlaneseq
    %v228 = vshrl.u32 %v227, 7
    %v229 = vsub.s32 1, %v228
    %v230 = vrot.slane %v83, %v229
    %231 = vset.pattern.permute.xlu0 7
    %232 = vperm.xlu0 %231, %v88
    %v233 = vpop.permute.xlu0 %232
    %v235 = vmin.f32 %v230, %v233
    %v236 = vlaneseq
    %v237 = vshrl.u32 %v236, 7
    %v238 = vsub.s32 1, %v237
    %v239 = vrot.slane %v82, %v238
    %240 = vset.pattern.permute.xlu0 5
    %241 = vperm.xlu0 %240, %v88
    %v242 = vpop.permute.xlu0 %241
    %v244 = vmax.f32 %v239, %v242
    %v245 = vsub.f32 %v235, %v244
    %v246 = vmax.f32 %v226, 0.0
    %v247 = vmax.f32 %v245, 0.0
    %v248 = vmul.f32 %v246, %v247
    %v249 = vlaneseq
    %v250 = vshrl.u32 %v249, 7
    %v251 = vsub.s32 2, %v250
    %v252 = vrot.slane %v87, %v251
    %253 = vset.pattern.permute.xlu0 8
    %254 = vperm.xlu0 %253, %v88
    %v255 = vpop.permute.xlu0 %254
    %v257 = vadd.f32 %v252, %v255
    %v258 = vsub.f32 %v257, %v248
    %v259 = vadd.f32 %v114, %v117
    %v260 = vsub.f32 %v259, %v226
    %v261 = vadd.f32 %v125, %v128
    %v262 = vsub.f32 %v261, %v245
    %v263 = vmul.f32 %v260, %v262
    %v264 = vadd.f32 %v263, 1e-10
    %v265 = vrcp.pop %v258
    %v266 = vmul.f32 %v258, %v265
    %v267 = vsub.f32 2.0, %v266
    %v268 = vmul.f32 %v265, %v267
    %v269 = vmul.f32 %v248, %v268
    %v270 = vrcp.pop %v264
    %v271 = vmul.f32 %v264, %v270
    %v272 = vsub.f32 2.0, %v271
    %v273 = vmul.f32 %v270, %v272
    %v274 = vmul.f32 %v258, %v273
    %v275 = vadd.f32 %v269, %v274
    %v276 = vmul.f32 %v275, 2.0
    %v277 = vsub.f32 %v205, %v276
    %278 = vst [vmem:[#allocation8] sm:$0xff] %v277
    // Predicated region
    $region30: #{tpu_custom_call.1} parent=1 // pred_check
      _
    $region31: #{tpu_custom_call.1} parent=1 // pred_check_branch
      %280 = sbr.rel (0) target = $region33
    $region32: #{tpu_custom_call.1} parent=1 // pred_region
      %s282 = ssub.s32 128, 128
      %283 = vsyncadd [#allocation4], %s282
      %s285 = sshll.u32 [#allocation8], 4
      %s286 = int_to_ptr.vmem [resolvable:$true] %s285
      %288 = dma.vmem_to_hbm [thread:$0]  %s286, 128, %s4, [#allocation4]
    $region33: #{tpu_custom_call.1} parent=1 // pred_fallthru
      _
    // Predicated region
    $region34: #{tpu_custom_call.1} parent=1 // pred_check
      _
    $region35: #{tpu_custom_call.1} parent=1 // pred_check_branch
      %290 = sbr.rel (0) target = $region37
    $region36: #{tpu_custom_call.1} parent=1 // pred_region
      %291 = dma.done [#allocation4], 128
    $region37: #{tpu_custom_call.1} parent=1 // pred_fallthru
      _
    %292 = vsyncpa [#allocation3], 1
    %293 = vsyncpa [#allocation6], 1
    %294 = vsyncpa [#allocation4], 1

</llo_original>
